<compile_context>
chip_gen: v5e
topology: v5e:2x2
jax: 0.10.0
libtpu: 0.0.40
codegen_flags: <defaults>
</compile_context>

<pallas_src>
import jax
import jax.numpy as jnp
from jax.experimental import pallas as pl
from jax.experimental.pallas import tpu as pltpu

# ---- module hyper-params (from the PyTorch source) ----
D_MODEL = 224
MAX_VOCAB = 1532 + 418 + 5      # 1955
N_SEGS = 2
LN_EPS = 1e-5                   # PyTorch nn.LayerNorm default

# ---- TPU layout choices ----
D_PAD = 256                     # 224 -> 256: lane-dense (multiple of 128) stores
TOKENS_PER_BLOCK = 8            # sublane-aligned token block per grid step


def _embeddings_kernel(
    x_idx_ref, seg_idx_ref,      # scalar-prefetch index streams (SMEM, int32)
    word_ref, seg_tab_ref,       # embedding tables, VMEM-resident full blocks
    g_ref, b_ref,                # LayerNorm gamma/beta, zero-padded to (1, D_PAD)
    o_ref,                       # (TB, D_PAD) output block
    emb_scratch,                 # (TB, D_PAD) VMEM scratch
):
    tb = o_ref.shape[0]
    base = pl.program_id(0) * tb

    # Gather: one dynamic row load per token from each VMEM-resident table.
    for s in range(tb):          # small fixed trip count, unrolled
        wi = x_idx_ref[base + s]
        si = seg_idx_ref[base + s]
        emb_scratch[pl.ds(s, 1), :] = (
            word_ref[pl.ds(wi, 1), :] + seg_tab_ref[pl.ds(si, 1), :]
        )

    emb = emb_scratch[...]       # (TB, D_PAD) f32; pad lanes are exactly 0

    # LayerNorm over the true 224 features (pad lanes masked out of the stats).
    lane = jax.lax.broadcasted_iota(jnp.int32, emb.shape, 1)
    valid = lane < D_MODEL
    mu = jnp.sum(emb, axis=-1, keepdims=True) * (1.0 / D_MODEL)   # pads contribute 0
    centered = jnp.where(valid, emb - mu, 0.0)
    var = jnp.sum(centered * centered, axis=-1, keepdims=True) * (1.0 / D_MODEL)
    xn = centered * jax.lax.rsqrt(var + LN_EPS)

    # gamma/beta are zero-padded, so pad lanes stay exactly 0 in the output.
    o_ref[...] = (xn * g_ref[...] + b_ref[...]).astype(o_ref.dtype)


def embeddings_forward(x_tok, seg_tok, params, *, tokens_per_block=TOKENS_PER_BLOCK):
    """x_tok: (B, S) int token ids, seg_tok: (B, S) int segment ids. Returns (B, S, 224)."""
    B, S = x_tok.shape
    N = B * S
    grid_n = max(pl.cdiv(N, tokens_per_block), 1)
    n_pad = grid_n * tokens_per_block

    # Flatten + pad token streams (pad tokens look up row 0; results are discarded).
    x_flat = jnp.pad(x_tok.reshape(-1).astype(jnp.int32), (0, n_pad - N))
    s_flat = jnp.pad(seg_tok.reshape(-1).astype(jnp.int32), (0, n_pad - N))

    # Pad the feature dim 224 -> 256 with zeros for lane-dense layout.
    pad_f = D_PAD - D_MODEL
    word = jnp.pad(params["word_emb"], ((0, 0), (0, pad_f)))
    segt = jnp.pad(params["seg_emb"], ((0, 0), (0, pad_f)))
    gamma = jnp.pad(params["ln_g"].reshape(1, D_MODEL), ((0, 0), (0, pad_f)))
    beta = jnp.pad(params["ln_b"].reshape(1, D_MODEL), ((0, 0), (0, pad_f)))

    full2 = lambda i, xr, sr: (0, 0)   # index_maps also receive the prefetch refs

    out = pl.pallas_call(
        _embeddings_kernel,
        out_shape=jax.ShapeDtypeStruct((n_pad, D_PAD), jnp.float32),
        grid_spec=pltpu.PrefetchScalarGridSpec(
            num_scalar_prefetch=2,
            grid=(grid_n,),
            in_specs=[
                pl.BlockSpec((MAX_VOCAB, D_PAD), full2),   # word table (resident)
                pl.BlockSpec((N_SEGS, D_PAD), full2),      # segment table
                pl.BlockSpec((1, D_PAD), full2),           # ln gamma
                pl.BlockSpec((1, D_PAD), full2),           # ln beta
            ],
            out_specs=pl.BlockSpec((tokens_per_block, D_PAD),
                                   lambda i, xr, sr: (i, 0)),
            scratch_shapes=[pltpu.VMEM((tokens_per_block, D_PAD), jnp.float32)],
        ),
        compiler_params=pltpu.CompilerParams(
            dimension_semantics=("parallel",),
        ),
    )(x_flat, s_flat, word, segt, gamma, beta)

    return out[:N, :D_MODEL].reshape(B, S, D_MODEL)


def _reference(x_tok, seg_tok, p):
    """Pure-JAX reference mirroring the PyTorch forward (dropout = identity)."""
    v = p["word_emb"][x_tok] + p["seg_emb"][seg_tok]
    mu = jnp.mean(v, axis=-1, keepdims=True)
    var = jnp.mean((v - mu) ** 2, axis=-1, keepdims=True)
    return (v - mu) / jnp.sqrt(var + LN_EPS) * p["ln_g"] + p["ln_b"]


def init_params(key):
    k1, k2 = jax.random.split(key)
    s = 0.02
    return {
        "word_emb": s * jax.random.normal(k1, (MAX_VOCAB, D_MODEL), jnp.float32),
        "seg_emb": s * jax.random.normal(k2, (N_SEGS, D_MODEL), jnp.float32),
        "ln_g": jnp.ones((D_MODEL,), jnp.float32),
        "ln_b": jnp.zeros((D_MODEL,), jnp.float32),
    }


if __name__ == "__main__":
    B, S = 2, 8
    key = jax.random.PRNGKey(0)
    kx, ks, kp = jax.random.split(key, 3)

    x_tok = jax.random.randint(kx, (B, S), 0, MAX_VOCAB, dtype=jnp.int32)
    seg_tok = jax.random.randint(ks, (B, S), 0, N_SEGS, dtype=jnp.int32)
    params = init_params(kp)

    out = embeddings_forward(x_tok, seg_tok, params)
    out = jax.block_until_ready(out)

    ref = _reference(x_tok, seg_tok, params)
    assert out.shape == (B, S, D_MODEL)
    assert jnp.allclose(out, ref, atol=1e-4, rtol=1e-4), "mismatch vs reference"

    print("KERNEL_OK")
</pallas_src>

<mosaic_0001>
module attributes {stable_mosaic.version = 11 : i64} {
  func.func @_embeddings_kernel(%arg0: i32, %arg1: memref<16xi32, #tpu.memory_space<smem>>, %arg2: memref<16xi32, #tpu.memory_space<smem>>, %arg3: memref<1955x256xf32, #tpu.memory_space<vmem>>, %arg4: memref<2x256xf32, #tpu.memory_space<vmem>>, %arg5: memref<1x256xf32, #tpu.memory_space<vmem>>, %arg6: memref<1x256xf32, #tpu.memory_space<vmem>>, %arg7: memref<8x256xf32, #tpu.memory_space<vmem>>, %arg8: memref<8x256xf32, #tpu.memory_space<vmem>>) attributes {dimension_semantics = [#tpu.dimension_semantics<parallel>], iteration_bounds = array<i64: 2>, scalar_prefetch = 2 : i64, scratch_operands = 1 : i64, tpu.core_type = #tpu.core_type<tc>, window_params = [{pipeline_mode = #tpu.pipeline_mode<synchronous>, transform_indices = @transform_0, window_bounds = array<i64: 1955, 256>}, {pipeline_mode = #tpu.pipeline_mode<synchronous>, transform_indices = @transform_1, window_bounds = array<i64: 2, 256>}, {pipeline_mode = #tpu.pipeline_mode<synchronous>, transform_indices = @transform_2, window_bounds = array<i64: 1, 256>}, {pipeline_mode = #tpu.pipeline_mode<synchronous>, transform_indices = @transform_3, window_bounds = array<i64: 1, 256>}, {transform_indices = @transform_4, window_bounds = array<i64: 8, 256>}]} {
    %c8_i32 = arith.constant 8 : i32
    %0 = arith.muli %arg0, %c8_i32 : i32
    %c0_i32 = arith.constant 0 : i32
    %1 = arith.addi %0, %c0_i32 : i32
    %2 = arith.index_cast %1 : i32 to index
    %3 = memref.load %arg1[%2] : memref<16xi32, #tpu.memory_space<smem>>
    %c0_i32_0 = arith.constant 0 : i32
    %4 = arith.addi %0, %c0_i32_0 : i32
    %5 = arith.index_cast %4 : i32 to index
    %6 = memref.load %arg2[%5] : memref<16xi32, #tpu.memory_space<smem>>
    %7 = arith.index_cast %3 : i32 to index
    %c0 = arith.constant 0 : index
    %8 = vector.load %arg3[%7, %c0] : memref<1955x256xf32, #tpu.memory_space<vmem>>, vector<1x256xf32>
    %9 = arith.index_cast %6 : i32 to index
    %c0_1 = arith.constant 0 : index
    %10 = vector.load %arg4[%9, %c0_1] : memref<2x256xf32, #tpu.memory_space<vmem>>, vector<1x256xf32>
    %11 = arith.addf %8, %10 : vector<1x256xf32>
    %c0_2 = arith.constant 0 : index
    %c0_3 = arith.constant 0 : index
    %12 = vector.load %arg8[%c0_2, %c0_3] : memref<8x256xf32, #tpu.memory_space<vmem>>, vector<1x256xf32>
    tpu.vector_store %arg8[%c0_2, %c0_3], %11 {strides = array<i32>} : memref<8x256xf32, #tpu.memory_space<vmem>>, vector<1x256xf32>,
    %c1_i32 = arith.constant 1 : i32
    %13 = arith.addi %0, %c1_i32 : i32
    %14 = arith.index_cast %13 : i32 to index
    %15 = memref.load %arg1[%14] : memref<16xi32, #tpu.memory_space<smem>>
    %c1_i32_4 = arith.constant 1 : i32
    %16 = arith.addi %0, %c1_i32_4 : i32
    %17 = arith.index_cast %16 : i32 to index
    %18 = memref.load %arg2[%17] : memref<16xi32, #tpu.memory_space<smem>>
    %19 = arith.index_cast %15 : i32 to index
    %c0_5 = arith.constant 0 : index
    %20 = vector.load %arg3[%19, %c0_5] : memref<1955x256xf32, #tpu.memory_space<vmem>>, vector<1x256xf32>
    %21 = arith.index_cast %18 : i32 to index
    %c0_6 = arith.constant 0 : index
    %22 = vector.load %arg4[%21, %c0_6] : memref<2x256xf32, #tpu.memory_space<vmem>>, vector<1x256xf32>
    %23 = arith.addf %20, %22 : vector<1x256xf32>
    %c1 = arith.constant 1 : index
    %c0_7 = arith.constant 0 : index
    %24 = vector.load %arg8[%c1, %c0_7] : memref<8x256xf32, #tpu.memory_space<vmem>>, vector<1x256xf32>
    tpu.vector_store %arg8[%c1, %c0_7], %23 {strides = array<i32>} : memref<8x256xf32, #tpu.memory_space<vmem>>, vector<1x256xf32>,
    %c2_i32 = arith.constant 2 : i32
    %25 = arith.addi %0, %c2_i32 : i32
    %26 = arith.index_cast %25 : i32 to index
    %27 = memref.load %arg1[%26] : memref<16xi32, #tpu.memory_space<smem>>
    %c2_i32_8 = arith.constant 2 : i32
    %28 = arith.addi %0, %c2_i32_8 : i32
    %29 = arith.index_cast %28 : i32 to index
    %30 = memref.load %arg2[%29] : memref<16xi32, #tpu.memory_space<smem>>
    %31 = arith.index_cast %27 : i32 to index
    %c0_9 = arith.constant 0 : index
    %32 = vector.load %arg3[%31, %c0_9] : memref<1955x256xf32, #tpu.memory_space<vmem>>, vector<1x256xf32>
    %33 = arith.index_cast %30 : i32 to index
    %c0_10 = arith.constant 0 : index
    %34 = vector.load %arg4[%33, %c0_10] : memref<2x256xf32, #tpu.memory_space<vmem>>, vector<1x256xf32>
    %35 = arith.addf %32, %34 : vector<1x256xf32>
    %c2 = arith.constant 2 : index
    %c0_11 = arith.constant 0 : index
    %36 = vector.load %arg8[%c2, %c0_11] : memref<8x256xf32, #tpu.memory_space<vmem>>, vector<1x256xf32>
    tpu.vector_store %arg8[%c2, %c0_11], %35 {strides = array<i32>} : memref<8x256xf32, #tpu.memory_space<vmem>>, vector<1x256xf32>,
    %c3_i32 = arith.constant 3 : i32
    %37 = arith.addi %0, %c3_i32 : i32
    %38 = arith.index_cast %37 : i32 to index
    %39 = memref.load %arg1[%38] : memref<16xi32, #tpu.memory_space<smem>>
    %c3_i32_12 = arith.constant 3 : i32
    %40 = arith.addi %0, %c3_i32_12 : i32
    %41 = arith.index_cast %40 : i32 to index
    %42 = memref.load %arg2[%41] : memref<16xi32, #tpu.memory_space<smem>>
    %43 = arith.index_cast %39 : i32 to index
    %c0_13 = arith.constant 0 : index
    %44 = vector.load %arg3[%43, %c0_13] : memref<1955x256xf32, #tpu.memory_space<vmem>>, vector<1x256xf32>
    %45 = arith.index_cast %42 : i32 to index
    %c0_14 = arith.constant 0 : index
    %46 = vector.load %arg4[%45, %c0_14] : memref<2x256xf32, #tpu.memory_space<vmem>>, vector<1x256xf32>
    %47 = arith.addf %44, %46 : vector<1x256xf32>
    %c3 = arith.constant 3 : index
    %c0_15 = arith.constant 0 : index
    %48 = vector.load %arg8[%c3, %c0_15] : memref<8x256xf32, #tpu.memory_space<vmem>>, vector<1x256xf32>
    tpu.vector_store %arg8[%c3, %c0_15], %47 {strides = array<i32>} : memref<8x256xf32, #tpu.memory_space<vmem>>, vector<1x256xf32>,
    %c4_i32 = arith.constant 4 : i32
    %49 = arith.addi %0, %c4_i32 : i32
    %50 = arith.index_cast %49 : i32 to index
    %51 = memref.load %arg1[%50] : memref<16xi32, #tpu.memory_space<smem>>
    %c4_i32_16 = arith.constant 4 : i32
    %52 = arith.addi %0, %c4_i32_16 : i32
    %53 = arith.index_cast %52 : i32 to index
    %54 = memref.load %arg2[%53] : memref<16xi32, #tpu.memory_space<smem>>
    %55 = arith.index_cast %51 : i32 to index
    %c0_17 = arith.constant 0 : index
    %56 = vector.load %arg3[%55, %c0_17] : memref<1955x256xf32, #tpu.memory_space<vmem>>, vector<1x256xf32>
    %57 = arith.index_cast %54 : i32 to index
    %c0_18 = arith.constant 0 : index
    %58 = vector.load %arg4[%57, %c0_18] : memref<2x256xf32, #tpu.memory_space<vmem>>, vector<1x256xf32>
    %59 = arith.addf %56, %58 : vector<1x256xf32>
    %c4 = arith.constant 4 : index
    %c0_19 = arith.constant 0 : index
    %60 = vector.load %arg8[%c4, %c0_19] : memref<8x256xf32, #tpu.memory_space<vmem>>, vector<1x256xf32>
    tpu.vector_store %arg8[%c4, %c0_19], %59 {strides = array<i32>} : memref<8x256xf32, #tpu.memory_space<vmem>>, vector<1x256xf32>,
    %c5_i32 = arith.constant 5 : i32
    %61 = arith.addi %0, %c5_i32 : i32
    %62 = arith.index_cast %61 : i32 to index
    %63 = memref.load %arg1[%62] : memref<16xi32, #tpu.memory_space<smem>>
    %c5_i32_20 = arith.constant 5 : i32
    %64 = arith.addi %0, %c5_i32_20 : i32
    %65 = arith.index_cast %64 : i32 to index
    %66 = memref.load %arg2[%65] : memref<16xi32, #tpu.memory_space<smem>>
    %67 = arith.index_cast %63 : i32 to index
    %c0_21 = arith.constant 0 : index
    %68 = vector.load %arg3[%67, %c0_21] : memref<1955x256xf32, #tpu.memory_space<vmem>>, vector<1x256xf32>
    %69 = arith.index_cast %66 : i32 to index
    %c0_22 = arith.constant 0 : index
    %70 = vector.load %arg4[%69, %c0_22] : memref<2x256xf32, #tpu.memory_space<vmem>>, vector<1x256xf32>
    %71 = arith.addf %68, %70 : vector<1x256xf32>
    %c5 = arith.constant 5 : index
    %c0_23 = arith.constant 0 : index
    %72 = vector.load %arg8[%c5, %c0_23] : memref<8x256xf32, #tpu.memory_space<vmem>>, vector<1x256xf32>
    tpu.vector_store %arg8[%c5, %c0_23], %71 {strides = array<i32>} : memref<8x256xf32, #tpu.memory_space<vmem>>, vector<1x256xf32>,
    %c6_i32 = arith.constant 6 : i32
    %73 = arith.addi %0, %c6_i32 : i32
    %74 = arith.index_cast %73 : i32 to index
    %75 = memref.load %arg1[%74] : memref<16xi32, #tpu.memory_space<smem>>
    %c6_i32_24 = arith.constant 6 : i32
    %76 = arith.addi %0, %c6_i32_24 : i32
    %77 = arith.index_cast %76 : i32 to index
    %78 = memref.load %arg2[%77] : memref<16xi32, #tpu.memory_space<smem>>
    %79 = arith.index_cast %75 : i32 to index
    %c0_25 = arith.constant 0 : index
    %80 = vector.load %arg3[%79, %c0_25] : memref<1955x256xf32, #tpu.memory_space<vmem>>, vector<1x256xf32>
    %81 = arith.index_cast %78 : i32 to index
    %c0_26 = arith.constant 0 : index
    %82 = vector.load %arg4[%81, %c0_26] : memref<2x256xf32, #tpu.memory_space<vmem>>, vector<1x256xf32>
    %83 = arith.addf %80, %82 : vector<1x256xf32>
    %c6 = arith.constant 6 : index
    %c0_27 = arith.constant 0 : index
    %84 = vector.load %arg8[%c6, %c0_27] : memref<8x256xf32, #tpu.memory_space<vmem>>, vector<1x256xf32>
    tpu.vector_store %arg8[%c6, %c0_27], %83 {strides = array<i32>} : memref<8x256xf32, #tpu.memory_space<vmem>>, vector<1x256xf32>,
    %c7_i32 = arith.constant 7 : i32
    %85 = arith.addi %0, %c7_i32 : i32
    %86 = arith.index_cast %85 : i32 to index
    %87 = memref.load %arg1[%86] : memref<16xi32, #tpu.memory_space<smem>>
    %c7_i32_28 = arith.constant 7 : i32
    %88 = arith.addi %0, %c7_i32_28 : i32
    %89 = arith.index_cast %88 : i32 to index
    %90 = memref.load %arg2[%89] : memref<16xi32, #tpu.memory_space<smem>>
    %91 = arith.index_cast %87 : i32 to index
    %c0_29 = arith.constant 0 : index
    %92 = vector.load %arg3[%91, %c0_29] : memref<1955x256xf32, #tpu.memory_space<vmem>>, vector<1x256xf32>
    %93 = arith.index_cast %90 : i32 to index
    %c0_30 = arith.constant 0 : index
    %94 = vector.load %arg4[%93, %c0_30] : memref<2x256xf32, #tpu.memory_space<vmem>>, vector<1x256xf32>
    %95 = arith.addf %92, %94 : vector<1x256xf32>
    %c7 = arith.constant 7 : index
    %c0_31 = arith.constant 0 : index
    %96 = vector.load %arg8[%c7, %c0_31] : memref<8x256xf32, #tpu.memory_space<vmem>>, vector<1x256xf32>
    tpu.vector_store %arg8[%c7, %c0_31], %95 {strides = array<i32>} : memref<8x256xf32, #tpu.memory_space<vmem>>, vector<1x256xf32>,
    %c0_32 = arith.constant 0 : index
    %c0_33 = arith.constant 0 : index
    %97 = vector.load %arg8[%c0_32, %c0_33] : memref<8x256xf32, #tpu.memory_space<vmem>>, vector<8x256xf32>
    %98 = tpu.iota {dimensions = array<i32: 1>} : vector<8x256xi32>
    %c224_i32 = arith.constant 224 : i32
    %99 = vector.broadcast %c224_i32 : i32 to vector<8x256xi32>
    %100 = arith.cmpi slt, %98, %99 : vector<8x256xi32>
    %cst = arith.constant dense<0.000000e+00> : vector<8xf32>
    %101 = vector.multi_reduction <add>, %97, %cst [1] : vector<8x256xf32> to vector<8xf32>
    %102 = vector.shape_cast %101 : vector<8xf32> to vector<8x1xf32>
    %cst_34 = arith.constant 0.00446428591 : f32
    %103 = vector.broadcast %cst_34 : f32 to vector<8x1xf32>
    %104 = arith.mulf %102, %103 : vector<8x1xf32>
    %105 = vector.broadcast %104 : vector<8x1xf32> to vector<8x256xf32>
    %106 = arith.subf %97, %105 : vector<8x256xf32>
    %cst_35 = arith.constant 0.000000e+00 : f32
    %107 = vector.broadcast %cst_35 : f32 to vector<8x256xf32>
    %108 = arith.select %100, %106, %107 : vector<8x256xi1>, vector<8x256xf32>
    %109 = arith.mulf %108, %108 : vector<8x256xf32>
    %cst_36 = arith.constant dense<0.000000e+00> : vector<8xf32>
    %110 = vector.multi_reduction <add>, %109, %cst_36 [1] : vector<8x256xf32> to vector<8xf32>
    %111 = vector.shape_cast %110 : vector<8xf32> to vector<8x1xf32>
    %cst_37 = arith.constant 0.00446428591 : f32
    %112 = vector.broadcast %cst_37 : f32 to vector<8x1xf32>
    %113 = arith.mulf %111, %112 : vector<8x1xf32>
    %cst_38 = arith.constant 9.99999974E-6 : f32
    %114 = vector.broadcast %cst_38 : f32 to vector<8x1xf32>
    %115 = arith.addf %113, %114 : vector<8x1xf32>
    %116 = math.rsqrt %115 : vector<8x1xf32>
    %117 = vector.broadcast %116 : vector<8x1xf32> to vector<8x256xf32>
    %118 = arith.mulf %108, %117 : vector<8x256xf32>
    %c0_39 = arith.constant 0 : index
    %c0_40 = arith.constant 0 : index
    %119 = vector.load %arg5[%c0_39, %c0_40] : memref<1x256xf32, #tpu.memory_space<vmem>>, vector<1x256xf32>
    %120 = vector.broadcast %119 : vector<1x256xf32> to vector<8x256xf32>
    %121 = arith.mulf %118, %120 : vector<8x256xf32>
    %c0_41 = arith.constant 0 : index
    %c0_42 = arith.constant 0 : index
    %122 = vector.load %arg6[%c0_41, %c0_42] : memref<1x256xf32, #tpu.memory_space<vmem>>, vector<1x256xf32>
    %123 = vector.broadcast %122 : vector<1x256xf32> to vector<8x256xf32>
    %124 = arith.addf %121, %123 : vector<8x256xf32>
    %c0_43 = arith.constant 0 : index
    %c0_44 = arith.constant 0 : index
    %125 = vector.load %arg7[%c0_43, %c0_44] : memref<8x256xf32, #tpu.memory_space<vmem>>, vector<8x256xf32>
    tpu.vector_store %arg7[%c0_43, %c0_44], %124 {strides = array<i32>} : memref<8x256xf32, #tpu.memory_space<vmem>>, vector<8x256xf32>,
    return
  }
  func.func @transform_0(%arg0: i32, %arg1: memref<16xi32, #tpu.memory_space<smem>>, %arg2: memref<16xi32, #tpu.memory_space<smem>>) -> (i32, i32) {
    %c0_i32 = arith.constant 0 : i32
    %c0_i32_0 = arith.constant 0 : i32
    %c0_i32_1 = arith.constant 0 : i32
    return %c0_i32, %c0_i32_0 : i32, i32
  }
  func.func @transform_1(%arg0: i32, %arg1: memref<16xi32, #tpu.memory_space<smem>>, %arg2: memref<16xi32, #tpu.memory_space<smem>>) -> (i32, i32) {
    %c0_i32 = arith.constant 0 : i32
    %c0_i32_0 = arith.constant 0 : i32
    %c0_i32_1 = arith.constant 0 : i32
    return %c0_i32, %c0_i32_0 : i32, i32
  }
  func.func @transform_2(%arg0: i32, %arg1: memref<16xi32, #tpu.memory_space<smem>>, %arg2: memref<16xi32, #tpu.memory_space<smem>>) -> (i32, i32) {
    %c0_i32 = arith.constant 0 : i32
    %c0_i32_0 = arith.constant 0 : i32
    %c0_i32_1 = arith.constant 0 : i32
    return %c0_i32, %c0_i32_0 : i32, i32
  }
  func.func @transform_3(%arg0: i32, %arg1: memref<16xi32, #tpu.memory_space<smem>>, %arg2: memref<16xi32, #tpu.memory_space<smem>>) -> (i32, i32) {
    %c0_i32 = arith.constant 0 : i32
    %c0_i32_0 = arith.constant 0 : i32
    %c0_i32_1 = arith.constant 0 : i32
    return %c0_i32, %c0_i32_0 : i32, i32
  }
  func.func @transform_4(%arg0: i32, %arg1: memref<16xi32, #tpu.memory_space<smem>>, %arg2: memref<16xi32, #tpu.memory_space<smem>>) -> (i32, i32) {
    %c0_i32 = arith.constant 0 : i32
    %c0_i32_0 = arith.constant 0 : i32
    return %arg0, %c0_i32 : i32, i32
  }
}

</mosaic_0001>

<llo_original>
// kernel: tpu_custom_call.1
$region0: #{tpu_custom_call.1}
  #allocation0 [shape = 'u32[]', space=smem, size = 0x4, offset = 0x4, fixed_abs, tag = 'smem constant byte address 0x4 - core index']
  #allocation1 [shape = 'u32[72,128]{1,0:T(1,128)}', space=vmem, size = 0x9000, scoped, tag = 'internal scratch']
  #allocation2 [shape = 'f32[8,256]{1,0:T(8,128)}', space=vmem, size = 0x2000, scoped, tag = 'scratch operand']
  #allocation3 [shape = 's32[1]{0}', space=sflag, size = 0x4, scoped, tag = 'scoped memory for tpu_custom_call.1']
  #allocation4 [shape = 'u8[512]{0}', space=smem, size = 0x200, scoped, tag = 'prefetched SMEM operand 0']
  #allocation5 [shape = 'u8[512]{0}', space=smem, size = 0x200, scoped, tag = 'prefetched SMEM operand 1']
  %s0 = inlined_call_operand.hbm [shape: s32[16], index: 0, kind: input, shape index: {}]
  %s1 = inlined_call_operand.hbm [shape: s32[16], index: 1, kind: input, shape index: {}]
  %s2 = inlined_call_operand.hbm [shape: f32[1955,256], index: 2, kind: input, shape index: {}]
  %s3 = inlined_call_operand.hbm [shape: f32[2,256], index: 3, kind: input, shape index: {}]
  %s4 = inlined_call_operand.hbm [shape: f32[1,256], index: 4, kind: input, shape index: {}]
  %s5 = inlined_call_operand.hbm [shape: f32[1,256], index: 5, kind: input, shape index: {}]
  %s6 = inlined_call_operand.hbm [shape: f32[16,256], index: 6, kind: output, shape index: {}]
  %s7 = sld [smem:[#allocation0]]
  $region65: #{tpu_custom_call.1} parent=0
    _
  %s9 = ssub.s32 1, %s7
  %s10 = scalar_select 0, %s9, %s7
  %s12 = sshll.u32 %s0, 4
  %s13 = int_to_ptr.hbm [resolvable:$true] %s12
  %15 = dma.hbm_to_smem %s13, 16, [#allocation4], [#allocation3]
  %s17 = sshll.u32 %s1, 4
  %s18 = int_to_ptr.hbm [resolvable:$true] %s17
  %20 = dma.hbm_to_smem %s18, 16, [#allocation5], [#allocation3]
  %22 = dma.done [#allocation3], 32
  %23 = sfence
  $region1: #{tpu_custom_call.1} parent=0
    #allocation6 [shape = 'u8[2007040]{0}', space=vmem, size = 0x1ea000, scoped, tag = 'input window, operand 2, single buffered']
    #allocation7 [shape = 's32[2]{0}', space=sflag, size = 0x8, scoped, tag = 'scoped memory for tpu_custom_call.1']
    #allocation8 [shape = 's32[2]{0}', space=sflag, size = 0x8, scoped, tag = 'scoped memory for tpu_custom_call.1']
    #allocation9 [shape = 'u8[2048]{0}', space=vmem, size = 0x800, scoped, tag = 'input window, operand 3, single buffered']
    #allocation10 [shape = 's32[1]{0}', space=sflag, size = 0x4, scoped, tag = 'scoped memory for tpu_custom_call.1']
    #allocation11 [shape = 'u8[1024]{0}', space=vmem, size = 0x400, scoped, tag = 'input window, operand 4, single buffered']
    #allocation12 [shape = 'u8[1024]{0}', space=vmem, size = 0x400, scoped, tag = 'input window, operand 5, single buffered']
    #allocation13 [shape = 's32[1]{0}', space=sflag, size = 0x4, scoped, tag = 'scoped memory for tpu_custom_call.1']
    #allocation14 [shape = 'u8[16384]{0}', space=vmem, size = 0x4000, scoped, tag = 'output window, operand 0']
    %24 = vsyncpa [#allocation7], 0
    %25 = vsyncpa [#allocation10], 0
    %26 = vsyncpa [#allocation13], 0
    %27 = vsyncpa [#allocation8], 0
    %s28 = scalar_lea.sflag [#allocation8], 1
    %29 = vsyncpa %s28, 0
    loop: start=0, step=1, limit=4
    $region2: #{tpu_custom_call.1} parent=1 // loop_pre_header
      _
    $region3: #{tpu_custom_call.1} parent=1 // loop_header
      %s31 = sphi 0, %s35
      %p32 = scmp.ge.s32.totalorder %s31, 4
      %s39 = sphi 0, %s39
      %s41 = sphi 0, %s39
      %s42 = sphi 0, %s41
      %s56 = sphi 0, %s42
      %s60 = sphi 0, %s60
      %s62 = sphi 0, %s60
      %s63 = sphi 0, %s62
      %s77 = sphi 0, %s63
      %s81 = sphi 0, %s81
      %s83 = sphi 0, %s81
      %s84 = sphi 0, %s83
      %s98 = sphi 0, %s84
      %s102 = sphi 0, %s102
      %s104 = sphi 0, %s102
      %s105 = sphi 0, %s104
      %s119 = sphi 0, %s105
      %s125 = sphi 0, %s127
      %s128 = sphi 0, %s125
      %s129 = sphi 0, %s128
      %s145 = sphi 0, %s129
    $region4: #{tpu_custom_call.1} parent=1 // loop_header_branch
      %34 = sbr.rel (%p32) target = $region8
    $region5: #{tpu_custom_call.1} parent=1 // loop_body
      %s36 = ssub.s32 %s31, 1
      %s37 = ssub.s32 %s31, 2
      %s38 = sadd.s32 %s31, 1
      %s40 = sadd.s32 %s39, 1
      %p43 = scmp.eq.s32.totalorder %s31, 1
      %p44 = scmp.ne.s32.totalorder %s39, %s41
      %p45 = scmp.eq.s32.totalorder %s31, 0
      %p46 = por %p44, %p45
      %p47 = scmp.ne.s32.totalorder %s39, %s41
      %p48 = scmp.eq.s32.totalorder %s36, 1
      %p49 = por %p47, %p48
      %p50 = scmp.ne.s32.totalorder %s41, %s42
      %p51 = scmp.eq.s32.totalorder %s36, 0
      %p52 = por %p50, %p51
      %p53 = scmp.ne.s32.totalorder %s41, %s42
      %p54 = scmp.eq.s32.totalorder %s37, 1
      %p55 = por %p53, %p54
      %p57 = scmp.ne.s32.totalorder %s42, %s56
      %p58 = scmp.eq.s32.totalorder %s37, 0
      %p59 = por %p57, %p58
      %s61 = sadd.s32 %s60, 1
      %p64 = scmp.eq.s32.totalorder %s31, 1
      %p65 = scmp.ne.s32.totalorder %s60, %s62
      %p66 = scmp.eq.s32.totalorder %s31, 0
      %p67 = por %p65, %p66
      %p68 = scmp.ne.s32.totalorder %s60, %s62
      %p69 = scmp.eq.s32.totalorder %s36, 1
      %p70 = por %p68, %p69
      %p71 = scmp.ne.s32.totalorder %s62, %s63
      %p72 = scmp.eq.s32.totalorder %s36, 0
      %p73 = por %p71, %p72
      %p74 = scmp.ne.s32.totalorder %s62, %s63
      %p75 = scmp.eq.s32.totalorder %s37, 1
      %p76 = por %p74, %p75
      %p78 = scmp.ne.s32.totalorder %s63, %s77
      %p79 = scmp.eq.s32.totalorder %s37, 0
      %p80 = por %p78, %p79
      %s82 = sadd.s32 %s81, 1
      %p85 = scmp.eq.s32.totalorder %s31, 1
      %p86 = scmp.ne.s32.totalorder %s81, %s83
      %p87 = scmp.eq.s32.totalorder %s31, 0
      %p88 = por %p86, %p87
      %p89 = scmp.ne.s32.totalorder %s81, %s83
      %p90 = scmp.eq.s32.totalorder %s36, 1
      %p91 = por %p89, %p90
      %p92 = scmp.ne.s32.totalorder %s83, %s84
      %p93 = scmp.eq.s32.totalorder %s36, 0
      %p94 = por %p92, %p93
      %p95 = scmp.ne.s32.totalorder %s83, %s84
      %p96 = scmp.eq.s32.totalorder %s37, 1
      %p97 = por %p95, %p96
      %p99 = scmp.ne.s32.totalorder %s84, %s98
      %p100 = scmp.eq.s32.totalorder %s37, 0
      %p101 = por %p99, %p100
      %s103 = sadd.s32 %s102, 1
      %p106 = scmp.eq.s32.totalorder %s31, 1
      %p107 = scmp.ne.s32.totalorder %s102, %s104
      %p108 = scmp.eq.s32.totalorder %s31, 0
      %p109 = por %p107, %p108
      %p110 = scmp.ne.s32.totalorder %s102, %s104
      %p111 = scmp.eq.s32.totalorder %s36, 1
      %p112 = por %p110, %p111
      %p113 = scmp.ne.s32.totalorder %s104, %s105
      %p114 = scmp.eq.s32.totalorder %s36, 0
      %p115 = por %p113, %p114
      %p116 = scmp.ne.s32.totalorder %s104, %s105
      %p117 = scmp.eq.s32.totalorder %s37, 1
      %p118 = por %p116, %p117
      %p120 = scmp.ne.s32.totalorder %s105, %s119
      %p121 = scmp.eq.s32.totalorder %s37, 0
      %p122 = por %p120, %p121
      %s123 = ssub.s32 %s31, %s38
      %p124 = scmp.eq.s32.totalorder %s123, 0
      %s126 = sadd.s32 %s125, 1
      %s127 = scalar_select %p124, %s125, %s126
      %p130 = pneg %p124
      %p131 = scmp.eq.s32.totalorder %s31, 1
      %p132 = por %p130, %p131
      %p133 = scmp.ne.s32.totalorder %s125, %s128
      %p134 = scmp.eq.s32.totalorder %s31, 0
      %p135 = por %p133, %p134
      %p136 = scmp.ne.s32.totalorder %s125, %s128
      %p137 = scmp.eq.s32.totalorder %s36, 1
      %p138 = por %p136, %p137
      %p139 = scmp.ne.s32.totalorder %s128, %s129
      %p140 = scmp.eq.s32.totalorder %s36, 0
      %p141 = por %p139, %p140
      %p142 = scmp.ne.s32.totalorder %s128, %s129
      %p143 = scmp.eq.s32.totalorder %s37, 1
      %p144 = por %p142, %p143
      %p146 = scmp.ne.s32.totalorder %s129, %s145
      %p147 = scmp.eq.s32.totalorder %s37, 0
      %p148 = por %p146, %p147
      %p149 = scmp.le.s32.totalorder 1, %s31
      %p150 = scmp.lt.s32.totalorder %s31, 3
      %p151 = pnand %p149, %p150
      %p152 = pneg %p151
      // Predicated region
      $region9: #{tpu_custom_call.1} parent=5 // pred_check
        _
      $region10: #{tpu_custom_call.1} parent=5 // pred_check_branch
        %154 = sbr.rel (%p151) target = $region12
      $region11: #{tpu_custom_call.1} parent=5 // pred_region
        %s155 = ssub.s32 %s31, 1
        // Predicated region
        $region13: #{tpu_custom_call.1} parent=11 // pred_check
          %p156 = pneg %p52
        $region14: #{tpu_custom_call.1} parent=11 // pred_check_branch
          %158 = sbr.rel (%p156) target = $region16
        $region15: #{tpu_custom_call.1} parent=11 // pred_region
          %160 = vsyncadd [#allocation7], 0
          %s161 = sshll.u32 %s2, 4
          %s162 = int_to_ptr.hbm [resolvable:$true] %s161
          %s163 = sshll.u32 [#allocation6], 4
          %s164 = int_to_ptr.vmem [resolvable:$true] %s163
          %169 = dma.hbm_to_vmem [thread:$0]  %s162, 62720, %s164, [#allocation7], 256, 256, 16
        $region16: #{tpu_custom_call.1} parent=11 // pred_fallthru
          _
        // Predicated region
        $region17: #{tpu_custom_call.1} parent=11 // pred_check
          %p170 = pneg %p73
        $region18: #{tpu_custom_call.1} parent=11 // pred_check_branch
          %172 = sbr.rel (%p170) target = $region20
        $region19: #{tpu_custom_call.1} parent=11 // pred_region
          %174 = vsyncadd [#allocation10], 0
          %s176 = sshll.u32 %s3, 4
          %s177 = int_to_ptr.hbm [resolvable:$true] %s176
          %s178 = sshll.u32 [#allocation9], 4
          %s179 = int_to_ptr.vmem [resolvable:$true] %s178
          %181 = dma.hbm_to_vmem [thread:$0]  %s177, 64, %s179, [#allocation10]
        $region20: #{tpu_custom_call.1} parent=11 // pred_fallthru
          _
        // Predicated region
        $region21: #{tpu_custom_call.1} parent=11 // pred_check
          %p182 = pneg %p94
        $region22: #{tpu_custom_call.1} parent=11 // pred_check_branch
          %184 = sbr.rel (%p182) target = $region24
        $region23: #{tpu_custom_call.1} parent=11 // pred_region
          %186 = vsyncadd [#allocation10], 0
          %s188 = sshll.u32 %s4, 4
          %s189 = int_to_ptr.hbm [resolvable:$true] %s188
          %s190 = sshll.u32 [#allocation11], 4
          %s191 = int_to_ptr.vmem [resolvable:$true] %s190
          %193 = dma.hbm_to_vmem [thread:$0]  %s189, 32, %s191, [#allocation10]
        $region24: #{tpu_custom_call.1} parent=11 // pred_fallthru
          _
        // Predicated region
        $region25: #{tpu_custom_call.1} parent=11 // pred_check
          %p194 = pneg %p115
        $region26: #{tpu_custom_call.1} parent=11 // pred_check_branch
          %196 = sbr.rel (%p194) target = $region28
        $region27: #{tpu_custom_call.1} parent=11 // pred_region
          %198 = vsyncadd [#allocation13], 0
          %s200 = sshll.u32 %s5, 4
          %s201 = int_to_ptr.hbm [resolvable:$true] %s200
          %s202 = sshll.u32 [#allocation12], 4
          %s203 = int_to_ptr.vmem [resolvable:$true] %s202
          %205 = dma.hbm_to_vmem [thread:$0]  %s201, 32, %s203, [#allocation13]
        $region28: #{tpu_custom_call.1} parent=11 // pred_fallthru
          _
      $region12: #{tpu_custom_call.1} parent=5 // pred_fallthru
        _
      %p206 = scmp.lt.s32.totalorder %s31, 2
      // Predicated region
      $region29: #{tpu_custom_call.1} parent=5 // pred_check
        %p207 = pneg %p206
      $region30: #{tpu_custom_call.1} parent=5 // pred_check_branch
        %209 = sbr.rel (%p207) target = $region32
      $region31: #{tpu_custom_call.1} parent=5 // pred_region
        _
      $region32: #{tpu_custom_call.1} parent=5 // pred_fallthru
        _
      %p210 = scmp.le.s32.totalorder 1, %s31
      %p211 = scmp.lt.s32.totalorder %s31, 3
      %p212 = pnand %p210, %p211
      %p213 = pneg %p212
      // Predicated region
      $region33: #{tpu_custom_call.1} parent=5 // pred_check
        _
      $region34: #{tpu_custom_call.1} parent=5 // pred_check_branch
        %215 = sbr.rel (%p212) target = $region36
      $region35: #{tpu_custom_call.1} parent=5 // pred_region
        %s216 = ssub.s32 %s31, 1
        // Predicated region
        $region37: #{tpu_custom_call.1} parent=35 // pred_check
          %p217 = pneg %p52
        $region38: #{tpu_custom_call.1} parent=35 // pred_check_branch
          %219 = sbr.rel (%p217) target = $region40
        $region39: #{tpu_custom_call.1} parent=35 // pred_region
          %221 = dma.done [#allocation7], 62720
        $region40: #{tpu_custom_call.1} parent=35 // pred_fallthru
          _
        // Predicated region
        $region41: #{tpu_custom_call.1} parent=35 // pred_check
          %p222 = pneg %p73
        $region42: #{tpu_custom_call.1} parent=35 // pred_check_branch
          %224 = sbr.rel (%p222) target = $region44
        $region43: #{tpu_custom_call.1} parent=35 // pred_region
          %226 = dma.done [#allocation10], 64
        $region44: #{tpu_custom_call.1} parent=35 // pred_fallthru
          _
        // Predicated region
        $region45: #{tpu_custom_call.1} parent=35 // pred_check
          %p227 = pneg %p94
        $region46: #{tpu_custom_call.1} parent=35 // pred_check_branch
          %229 = sbr.rel (%p227) target = $region48
        $region47: #{tpu_custom_call.1} parent=35 // pred_region
          %231 = dma.done [#allocation10], 32
        $region48: #{tpu_custom_call.1} parent=35 // pred_fallthru
          _
        // Predicated region
        $region49: #{tpu_custom_call.1} parent=35 // pred_check
          %p232 = pneg %p115
        $region50: #{tpu_custom_call.1} parent=35 // pred_check_branch
          %234 = sbr.rel (%p232) target = $region52
        $region51: #{tpu_custom_call.1} parent=35 // pred_region
          %236 = dma.done [#allocation13], 32
        $region52: #{tpu_custom_call.1} parent=35 // pred_fallthru
          _
        %p237 = pneg %p52
        %p238 = pneg %p49
        %p239 = pneg %p73
        %p240 = pneg %p70
        %p241 = pneg %p94
        %p242 = pneg %p91
        %p243 = pneg %p115
        %p244 = pneg %p112
        %p245 = pneg %p141
        %p246 = pneg %p138
        %s247 = sand.u32 %s128, 1
        %s248 = scalar_lea.sflag [#allocation8], %s247
        %s249 = sand.u32 %s128, 1
        %s250 = smul.addr %s249, 16
        %s251 = scalar_lea.vmem [#allocation14], %s250
        %s252 = smul.u32 %s36, 8
        %s253 = sld [smem:[#allocation4 + %s252]]
        %s254 = sld [smem:[#allocation5 + %s252]]
        %s255 = sshra.s32 %s253, 3
        %s256 = sand.u32 %s253, 7
        %s257 = sshra.s32 %s253, 3
        %s258 = sand.u32 %s253, 7
        %s259 = smul.u32 %s255, 2
        %s260 = smul.u32 %s259, 8
        %s261 = sadd.s32 %s260, %s258
        %s262 = scalar_lea.vmem [#allocation6], %s261
        %v263 = vld [vmem:[%s262] ss:$8 sm:$0x3]
        %s264 = sshra.s32 %s254, 1
        %s265 = sand.u32 %s254, 1
        %s266 = sshra.s32 %s254, 1
        %s267 = sand.u32 %s254, 1
        %s268 = smul.u32 %s264, 2
        %s269 = smul.u32 %s268, 2
        %s270 = sadd.s32 %s269, %s267
        %s271 = scalar_lea.vmem [#allocation9], %s270
        %v272 = vld [vmem:[%s271] ss:$2 sm:$0x3]
        %v273 = vadd.f32 %v263, %v272
        %v274 = vlaneseq
        %vm275 = vcmp.ge.s32.totalorder %v274, 0
        %vm276 = vcmp.lt.s32.totalorder %v274, 256
        %vm277 = vmand %vm275, %vm276
        %278 = vst.msk [vmem:[#allocation2] ss:$8 sm:$0x3] %vm277, %v273
        %279 = vst.msk [vmem:[#allocation2] ss:$8 sm:$0x0] %vm277, %v273
        %s280 = sadd.s32 %s252, 1
        %s281 = sld [smem:[#allocation4 + %s280]]
        %s282 = sld [smem:[#allocation5 + %s280]]
        %s283 = sshra.s32 %s281, 3
        %s284 = sand.u32 %s281, 7
        %s285 = sshra.s32 %s281, 3
        %s286 = sand.u32 %s281, 7
        %s287 = smul.u32 %s283, 2
        %s288 = smul.u32 %s287, 8
        %s289 = sadd.s32 %s288, %s286
        %s290 = scalar_lea.vmem [#allocation6], %s289
        %v291 = vld [vmem:[%s290] ss:$8 sm:$0x3]
        %s292 = sshra.s32 %s282, 1
        %s293 = sand.u32 %s282, 1
        %s294 = sshra.s32 %s282, 1
        %s295 = sand.u32 %s282, 1
        %s296 = smul.u32 %s292, 2
        %s297 = smul.u32 %s296, 2
        %s298 = sadd.s32 %s297, %s295
        %s299 = scalar_lea.vmem [#allocation9], %s298
        %v300 = vld [vmem:[%s299] ss:$2 sm:$0x3]
        %v301 = vadd.f32 %v291, %v300
        %s302 = scalar_lea.vmem [#allocation2], 1
        %303 = vst.msk [vmem:[%s302] ss:$8 sm:$0x3] %vm277, %v301
        %304 = vst.msk [vmem:[%s302] ss:$8 sm:$0x0] %vm277, %v301
        %s305 = sadd.s32 %s252, 2
        %s306 = sld [smem:[#allocation4 + %s305]]
        %s307 = sld [smem:[#allocation5 + %s305]]
        %s308 = sshra.s32 %s306, 3
        %s309 = sand.u32 %s306, 7
        %s310 = sshra.s32 %s306, 3
        %s311 = sand.u32 %s306, 7
        %s312 = smul.u32 %s308, 2
        %s313 = smul.u32 %s312, 8
        %s314 = sadd.s32 %s313, %s311
        %s315 = scalar_lea.vmem [#allocation6], %s314
        %v316 = vld [vmem:[%s315] ss:$8 sm:$0x3]
        %s317 = sshra.s32 %s307, 1
        %s318 = sand.u32 %s307, 1
        %s319 = sshra.s32 %s307, 1
        %s320 = sand.u32 %s307, 1
        %s321 = smul.u32 %s317, 2
        %s322 = smul.u32 %s321, 2
        %s323 = sadd.s32 %s322, %s320
        %s324 = scalar_lea.vmem [#allocation9], %s323
        %v325 = vld [vmem:[%s324] ss:$2 sm:$0x3]
        %v326 = vadd.f32 %v316, %v325
        %s327 = scalar_lea.vmem [#allocation2], 2
        %328 = vst.msk [vmem:[%s327] ss:$8 sm:$0x3] %vm277, %v326
        %329 = vst.msk [vmem:[%s327] ss:$8 sm:$0x0] %vm277, %v326
        %s330 = sadd.s32 %s252, 3
        %s331 = sld [smem:[#allocation4 + %s330]]
        %s332 = sld [smem:[#allocation5 + %s330]]
        %s333 = sshra.s32 %s331, 3
        %s334 = sand.u32 %s331, 7
        %s335 = sshra.s32 %s331, 3
        %s336 = sand.u32 %s331, 7
        %s337 = smul.u32 %s333, 2
        %s338 = smul.u32 %s337, 8
        %s339 = sadd.s32 %s338, %s336
        %s340 = scalar_lea.vmem [#allocation6], %s339
        %v341 = vld [vmem:[%s340] ss:$8 sm:$0x3]
        %s342 = sshra.s32 %s332, 1
        %s343 = sand.u32 %s332, 1
        %s344 = sshra.s32 %s332, 1
        %s345 = sand.u32 %s332, 1
        %s346 = smul.u32 %s342, 2
        %s347 = smul.u32 %s346, 2
        %s348 = sadd.s32 %s347, %s345
        %s349 = scalar_lea.vmem [#allocation9], %s348
        %v350 = vld [vmem:[%s349] ss:$2 sm:$0x3]
        %v351 = vadd.f32 %v341, %v350
        %s352 = scalar_lea.vmem [#allocation2], 3
        %353 = vst.msk [vmem:[%s352] ss:$8 sm:$0x3] %vm277, %v351
        %354 = vst.msk [vmem:[%s352] ss:$8 sm:$0x0] %vm277, %v351
        %s355 = sadd.s32 %s252, 4
        %s356 = sld [smem:[#allocation4 + %s355]]
        %s357 = sld [smem:[#allocation5 + %s355]]
        %s358 = sshra.s32 %s356, 3
        %s359 = sand.u32 %s356, 7
        %s360 = sshra.s32 %s356, 3
        %s361 = sand.u32 %s356, 7
        %s362 = smul.u32 %s358, 2
        %s363 = smul.u32 %s362, 8
        %s364 = sadd.s32 %s363, %s361
        %s365 = scalar_lea.vmem [#allocation6], %s364
        %v366 = vld [vmem:[%s365] ss:$8 sm:$0x3]
        %s367 = sshra.s32 %s357, 1
        %s368 = sand.u32 %s357, 1
        %s369 = sshra.s32 %s357, 1
        %s370 = sand.u32 %s357, 1
        %s371 = smul.u32 %s367, 2
        %s372 = smul.u32 %s371, 2
        %s373 = sadd.s32 %s372, %s370
        %s374 = scalar_lea.vmem [#allocation9], %s373
        %v375 = vld [vmem:[%s374] ss:$2 sm:$0x3]
        %v376 = vadd.f32 %v366, %v375
        %s377 = scalar_lea.vmem [#allocation2], 4
        %378 = vst.msk [vmem:[%s377] ss:$8 sm:$0x3] %vm277, %v376
        %379 = vst.msk [vmem:[%s377] ss:$8 sm:$0x0] %vm277, %v376
        %s380 = sadd.s32 %s252, 5
        %s381 = sld [smem:[#allocation4 + %s380]]
        %s382 = sld [smem:[#allocation5 + %s380]]
        %s383 = sshra.s32 %s381, 3
        %s384 = sand.u32 %s381, 7
        %s385 = sshra.s32 %s381, 3
        %s386 = sand.u32 %s381, 7
        %s387 = smul.u32 %s383, 2
        %s388 = smul.u32 %s387, 8
        %s389 = sadd.s32 %s388, %s386
        %s390 = scalar_lea.vmem [#allocation6], %s389
        %v391 = vld [vmem:[%s390] ss:$8 sm:$0x3]
        %s392 = sshra.s32 %s382, 1
        %s393 = sand.u32 %s382, 1
        %s394 = sshra.s32 %s382, 1
        %s395 = sand.u32 %s382, 1
        %s396 = smul.u32 %s392, 2
        %s397 = smul.u32 %s396, 2
        %s398 = sadd.s32 %s397, %s395
        %s399 = scalar_lea.vmem [#allocation9], %s398
        %v400 = vld [vmem:[%s399] ss:$2 sm:$0x3]
        %v401 = vadd.f32 %v391, %v400
        %s402 = scalar_lea.vmem [#allocation2], 5
        %403 = vst.msk [vmem:[%s402] ss:$8 sm:$0x3] %vm277, %v401
        %404 = vst.msk [vmem:[%s402] ss:$8 sm:$0x0] %vm277, %v401
        %s405 = sadd.s32 %s252, 6
        %s406 = sld [smem:[#allocation4 + %s405]]
        %s407 = sld [smem:[#allocation5 + %s405]]
        %s408 = sshra.s32 %s406, 3
        %s409 = sand.u32 %s406, 7
        %s410 = sshra.s32 %s406, 3
        %s411 = sand.u32 %s406, 7
        %s412 = smul.u32 %s408, 2
        %s413 = smul.u32 %s412, 8
        %s414 = sadd.s32 %s413, %s411
        %s415 = scalar_lea.vmem [#allocation6], %s414
        %v416 = vld [vmem:[%s415] ss:$8 sm:$0x3]
        %s417 = sshra.s32 %s407, 1
        %s418 = sand.u32 %s407, 1
        %s419 = sshra.s32 %s407, 1
        %s420 = sand.u32 %s407, 1
        %s421 = smul.u32 %s417, 2
        %s422 = smul.u32 %s421, 2
        %s423 = sadd.s32 %s422, %s420
        %s424 = scalar_lea.vmem [#allocation9], %s423
        %v425 = vld [vmem:[%s424] ss:$2 sm:$0x3]
        %v426 = vadd.f32 %v416, %v425
        %s427 = scalar_lea.vmem [#allocation2], 6
        %428 = vst.msk [vmem:[%s427] ss:$8 sm:$0x3] %vm277, %v426
        %429 = vst.msk [vmem:[%s427] ss:$8 sm:$0x0] %vm277, %v426
        %s430 = sadd.s32 %s252, 7
        %s431 = sld [smem:[#allocation4 + %s430]]
        %s432 = sld [smem:[#allocation5 + %s430]]
        %s433 = sshra.s32 %s431, 3
        %s434 = sand.u32 %s431, 7
        %s435 = sshra.s32 %s431, 3
        %s436 = sand.u32 %s431, 7
        %s437 = smul.u32 %s433, 2
        %s438 = smul.u32 %s437, 8
        %s439 = sadd.s32 %s438, %s436
        %s440 = scalar_lea.vmem [#allocation6], %s439
        %v441 = vld [vmem:[%s440] ss:$8 sm:$0x3]
        %s442 = sshra.s32 %s432, 1
        %s443 = sand.u32 %s432, 1
        %s444 = sshra.s32 %s432, 1
        %s445 = sand.u32 %s432, 1
        %s446 = smul.u32 %s442, 2
        %s447 = smul.u32 %s446, 2
        %s448 = sadd.s32 %s447, %s445
        %s449 = scalar_lea.vmem [#allocation9], %s448
        %v450 = vld [vmem:[%s449] ss:$2 sm:$0x3]
        %v451 = vadd.f32 %v441, %v450
        %s452 = scalar_lea.vmem [#allocation2], 7
        %453 = vst.msk [vmem:[%s452] ss:$8 sm:$0x3] %vm277, %v451
        %454 = vst.msk [vmem:[%s452] ss:$8 sm:$0x0] %vm277, %v451
        %v455 = vld [vmem:[#allocation2] sm:$0xff]
        %v456 = vld [vmem:[#allocation2 + $0x8] sm:$0xff]
        %v457 = vlaneseq
        %v458 = vand.u32 %v457, 127
        %v459 = vadd.s32 %v458, 128
        %vm460 = vcmp.lt.s32.totalorder %v458, 224
        %vm461 = vcmp.lt.s32.totalorder %v459, 224
        %v462 = vadd.f32 %v455, %v456
        %463 = vadd.xlane.f32.xlu0 %v462
        %v464 = vpop.xlane.xlu0 %463
        %v465 = vmul.f32 %v464, 0.004464286
        %v466 = vsub.f32 %v455, %v465
        %v467 = vsub.f32 %v456, %v465
        %v468 = vsel %vm460, %v466, 0.0
        %v469 = vsel %vm461, %v467, 0.0
        %v470 = vmul.f32 %v468, %v468
        %v471 = vmul.f32 %v469, %v469
        %v472 = vadd.f32 %v470, %v471
        %473 = vadd.xlane.f32.xlu0 %v472
        %v474 = vpop.xlane.xlu0 %473
        %v475 = vmul.f32 %v474, 0.004464286
        %v476 = vadd.f32 %v475, 1e-05
        %v477 = vrsqrt.pop %v476
        %v478 = vmul.f32 %v477, %v476
        %v479 = vmul.f32 %v478, %v477
        %v480 = vmul.f32 0.5, %v479
        %v481 = vsub.f32 1.5, %v480
        %v482 = vmul.f32 %v477, %v481
        %vm483 = vweird.f32 %v476
        %vm484 = vweird.f32 %v477
        %vm485 = vmor %vm483, %vm484
        %v486 = vsel %vm485, %v477, %v482
        %v487 = vmul.f32 %v468, %v486
        %v488 = vmul.f32 %v469, %v486
        %v489 = vld [vmem:[#allocation11] sm:$0x3]
        %v491 = vperm.slane %v489, 0
        %v492 = vperm.slane %v489, 1
        %v495 = vmul.f32 %v487, %v491
        %v496 = vmul.f32 %v488, %v492
        %v497 = vld [vmem:[#allocation12] sm:$0x3]
        %v499 = vperm.slane %v497, 0
        %v500 = vperm.slane %v497, 1
        %v503 = vadd.f32 %v495, %v499
        %v504 = vadd.f32 %v496, %v500
        %505 = vst [vmem:[%s251] sm:$0xff] %v503
        %506 = vst [vmem:[%s251 + $0x8] sm:$0xff] %v504
        %s507 = sand.u32 %s128, 1
        %s508 = scalar_lea.sflag [#allocation8], %s507
        %s509 = sand.u32 %s128, 1
        %s510 = smul.addr %s509, 16
        %s511 = scalar_lea.vmem [#allocation14], %s510
        // Predicated region
        $region53: #{tpu_custom_call.1} parent=35 // pred_check
          %p512 = pneg %p138
        $region54: #{tpu_custom_call.1} parent=35 // pred_check_branch
          %514 = sbr.rel (%p512) target = $region56
        $region55: #{tpu_custom_call.1} parent=35 // pred_region
          %516 = vsyncadd %s508, 0
          %s517 = smul.addr %s36, 2
          %s518 = smul.addr %s517, 8
          %s519 = scalar_lea.hbm %s6, %s518
          %s521 = sshll.u32 %s511, 4
          %s522 = int_to_ptr.vmem [resolvable:$true] %s521
          %s523 = sshll.u32 %s519, 4
          %s524 = int_to_ptr.hbm [resolvable:$true] %s523
          %526 = dma.vmem_to_hbm [thread:$0]  %s522, 256, %s524, %s508
        $region56: #{tpu_custom_call.1} parent=35 // pred_fallthru
          _
      $region36: #{tpu_custom_call.1} parent=5 // pred_fallthru
        _
      %p527 = scmp.le.s32.totalorder 2, %s31
      // Predicated region
      $region57: #{tpu_custom_call.1} parent=5 // pred_check
        %p528 = pneg %p527
      $region58: #{tpu_custom_call.1} parent=5 // pred_check_branch
        %530 = sbr.rel (%p528) target = $region60
      $region59: #{tpu_custom_call.1} parent=5 // pred_region
        %s531 = ssub.s32 %s31, 2
        // Predicated region
        $region61: #{tpu_custom_call.1} parent=59 // pred_check
          %p532 = pneg %p144
        $region62: #{tpu_custom_call.1} parent=59 // pred_check_branch
          %534 = sbr.rel (%p532) target = $region64
        $region63: #{tpu_custom_call.1} parent=59 // pred_region
          %s535 = sand.u32 %s129, 1
          %s536 = scalar_lea.sflag [#allocation8], %s535
          %s537 = sand.u32 %s129, 1
          %s538 = smul.addr %s537, 16
          %s539 = scalar_lea.vmem [#allocation14], %s538
          %541 = dma.done %s536, 256
        $region64: #{tpu_custom_call.1} parent=59 // pred_fallthru
          _
      $region60: #{tpu_custom_call.1} parent=5 // pred_fallthru
        _
    $region6: #{tpu_custom_call.1} parent=1 // loop_footer
      %s35 = sadd.s32 1, %s31
    $region7: #{tpu_custom_call.1} parent=1 // loop_footer_branch
      %30 = sbr.rel target = $region3
    $region8: #{tpu_custom_call.1} parent=1 // loop_exit
      _
    %542 = vsyncpa [#allocation7], 1
    %s543 = scalar_lea.sflag [#allocation7], 1
    %544 = vsyncpa %s543, 1
    %545 = vsyncpa [#allocation10], 1
    %546 = vsyncpa [#allocation13], 1
    %547 = vsyncpa [#allocation8], 1
    %s548 = scalar_lea.sflag [#allocation8], 1
    %549 = vsyncpa %s548, 1

</llo_original>
